<compile_context>
chip_gen: v7x
topology: tpu7x:2x2x1
jax: 0.10.0
libtpu: 0.0.40
codegen_flags: <defaults>
</compile_context>

<pallas_src>
import functools
import math

import jax
import jax.numpy as jnp
from jax.experimental import pallas as pl
from jax.experimental.pallas import tpu as pltpu

# ----------------------------- KAN constants --------------------------------
GRID_SIZE = 5
SPLINE_ORDER = 3
GRID_RANGE = (-1.0, 1.0)
NUM_COEFF = GRID_SIZE + SPLINE_ORDER               # 8 basis functions / feature
NUM_KNOTS = GRID_SIZE + 2 * SPLINE_ORDER + 1       # 12 knots
_H = (GRID_RANGE[1] - GRID_RANGE[0]) / GRID_SIZE
# efficient-kan uses the same uniform knot grid for every input feature, so the
# knots are compile-time scalars.
KNOTS = tuple(GRID_RANGE[0] + (j - SPLINE_ORDER) * _H for j in range(NUM_KNOTS))

_VMEM_LIMIT = 64 * 1024 * 1024


def _pick_tile(n, candidates=(512, 256, 128, 64, 32, 16, 8)):
    for c in candidates:
        if n % c == 0:
            return c
    return n


# --------------------------- in-kernel elementwise ---------------------------
def _erf_poly(x):
    # Abramowitz & Stegun 7.1.26, |abs err| < 1.5e-7 (== exact erf at f32 level).
    a1, a2, a3, a4, a5 = 0.254829592, -0.284496736, 1.421413741, -1.453152027, 1.061405429
    p = 0.3275911
    ax = jnp.abs(x)
    t = 1.0 / (1.0 + p * ax)
    poly = ((((a5 * t + a4) * t + a3) * t + a2) * t + a1) * t
    y = 1.0 - poly * jnp.exp(-ax * ax)
    return jnp.where(x >= 0.0, y, -y)


def _gelu_exact(x):
    return 0.5 * x * (1.0 + _erf_poly(x * 0.7071067811865476))


# --------------------------- fused KAN linear kernel -------------------------
# Computes  out = [RMSNorm?] -> (SiLU base + B-spline) linear -> [GELU?] -> [+res?]
# as a single long-K matmul:  features (tm, 9D) @ w_comb (9D, tn).
def _kan_kernel(*refs, norm_scale, activation, has_norm, has_res):
    it = iter(refs)
    x_ref = next(it)
    w_ref = next(it)
    g_ref = next(it) if has_norm else None
    r_ref = next(it) if has_res else None
    o_ref = next(it)
    feat_ref = next(it)

    # Features depend only on the M tile -> compute once, reuse across N tiles.
    @pl.when(pl.program_id(1) == 0)
    def _():
        x = x_ref[...].astype(jnp.float32)                      # (tm, D)
        if has_norm:
            # RMSNorm == F.normalize(x, dim=-1) * sqrt(D) * gamma
            inv = norm_scale / jnp.maximum(
                jnp.sqrt(jnp.sum(x * x, axis=-1, keepdims=True)), 1e-12)
            x = x * inv * g_ref[...].astype(jnp.float32)

        silu = x * jax.nn.sigmoid(x)                            # EUP sigmoid

        # B-spline bases via Cox-de Boor recursion (knots are compile-time, so
        # all divisions below fold to constant multiplies).
        # Degree-0: one comparison per knot; indicator = ge[j] - ge[j+1].
        ge = [(x >= k).astype(jnp.float32) for k in KNOTS]
        bases = [ge[j] - ge[j + 1] for j in range(NUM_KNOTS - 1)]
        for k in range(1, SPLINE_ORDER + 1):
            bases = [
                (x - KNOTS[j]) / (KNOTS[j + k] - KNOTS[j]) * bases[j]
                + (KNOTS[j + k + 1] - x) / (KNOTS[j + k + 1] - KNOTS[j + 1]) * bases[j + 1]
                for j in range(len(bases) - 1)
            ]                                                   # NUM_COEFF x (tm, D)

        feat = jnp.concatenate([silu] + bases, axis=-1)         # (tm, 9*D)
        feat_ref[...] = feat.astype(feat_ref.dtype)             # bf16 MXU operand

    acc = jnp.dot(feat_ref[...], w_ref[...],                    # bf16 x bf16 -> f32
                  preferred_element_type=jnp.float32)           # (tm, tn)

    if activation == "gelu":
        acc = _gelu_exact(acc)
    if has_res:
        acc = acc + r_ref[...].astype(jnp.float32)

    o_ref[...] = acc.astype(o_ref.dtype)


def kan_linear(x, w_comb, *, gamma=None, residual=None, activation=None):
    """x: (M, D) f32;  w_comb: (9*D, O) bf16 (base + 8 spline weights stacked).

    Optionally fuses a leading RMSNorm (gamma), a trailing exact GELU, and a
    trailing residual add.
    """
    M, D = x.shape
    K, O = w_comb.shape
    assert K == (NUM_COEFF + 1) * D
    tm = _pick_tile(M)
    tn = _pick_tile(O, (512, 256, 128))
    gm, gn = M // tm, O // tn

    in_specs = [pl.BlockSpec((tm, D), lambda i, j: (i, 0)),
                pl.BlockSpec((K, tn), lambda i, j: (0, j))]
    args = [x, w_comb]
    if gamma is not None:
        in_specs.append(pl.BlockSpec((1, D), lambda i, j: (0, 0)))
        args.append(gamma.reshape(1, D))
    if residual is not None:
        in_specs.append(pl.BlockSpec((tm, tn), lambda i, j: (i, j)))
        args.append(residual)

    kernel = functools.partial(
        _kan_kernel,
        norm_scale=float(D) ** 0.5,
        activation=activation,
        has_norm=gamma is not None,
        has_res=residual is not None)

    return pl.pallas_call(
        kernel,
        out_shape=jax.ShapeDtypeStruct((M, O), x.dtype),
        grid=(gm, gn),
        in_specs=in_specs,
        out_specs=pl.BlockSpec((tm, tn), lambda i, j: (i, j)),
        scratch_shapes=[pltpu.VMEM((tm, K), jnp.bfloat16)],
        compiler_params=pltpu.CompilerParams(
            dimension_semantics=("parallel", "arbitrary"),
            vmem_limit_bytes=_VMEM_LIMIT),
    )(*args)


# ------------------------------ Attention kernel ----------------------------
# One grid step = one batch element, all heads.  Reads the (T, 3D) qkv slab,
# applies RoPE at full width D, then per-head softmax attention; writes one
# lane-dense (T, D) output.
def _attn_kernel(qkv_ref, cos_ref, sin_ref, rot_ref, o_ref, *, heads, dim_head, scale):
    D = heads * dim_head
    qkv = qkv_ref[...].astype(jnp.float32)                      # (T, 3D)
    cos = cos_ref[...]                                          # (T, D)
    sin = sin_ref[...]
    R = rot_ref[...]                                            # (D, D) rotate_half

    q = qkv[:, :D]
    k = qkv[:, D:2 * D]
    v = qkv[:, 2 * D:]

    # RoPE on the full width (each head shares the same cos/sin table).
    q = q * cos + jnp.dot(q, R, preferred_element_type=jnp.float32) * sin
    k = k * cos + jnp.dot(k, R, preferred_element_type=jnp.float32) * sin
    # Pre-apply the softmax scale to q: one (T, D) multiply instead of a
    # (T, T) multiply per head.
    q = q * scale

    outs = []
    for h in range(heads):
        sl = slice(h * dim_head, (h + 1) * dim_head)
        qh, kh, vh = q[:, sl], k[:, sl], v[:, sl]
        s = jax.lax.dot_general(qh, kh, (((1,), (1,)), ((), ())),
                                preferred_element_type=jnp.float32)          # (T, T)
        s = s - jnp.max(s, axis=-1, keepdims=True)
        p = jnp.exp(s)
        p = p * pl.reciprocal(jnp.sum(p, axis=-1, keepdims=True), approx=True)
        outs.append(jnp.dot(p, vh, preferred_element_type=jnp.float32))      # (T, Dh)

    # Single lane-dense (T, D) store.
    o_ref[...] = jnp.concatenate(outs, axis=-1).astype(o_ref.dtype)


def attention(qkv, cos, sin, rot, heads, dim_head, scale):
    """qkv: (B, T, 3*D).  Full (non-causal) softmax attention + RoPE."""
    B, T, threeD = qkv.shape
    D = heads * dim_head
    assert threeD == 3 * D
    return pl.pallas_call(
        functools.partial(_attn_kernel, heads=heads, dim_head=dim_head, scale=scale),
        out_shape=jax.ShapeDtypeStruct((B, T, D), qkv.dtype),
        grid=(B,),
        in_specs=[pl.BlockSpec((None, T, threeD), lambda b: (b, 0, 0)),
                  pl.BlockSpec((T, D), lambda b: (0, 0)),
                  pl.BlockSpec((T, D), lambda b: (0, 0)),
                  pl.BlockSpec((D, D), lambda b: (0, 0))],
        out_specs=pl.BlockSpec((None, T, D), lambda b: (b, 0, 0)),
        compiler_params=pltpu.CompilerParams(
            dimension_semantics=("parallel",),
            vmem_limit_bytes=_VMEM_LIMIT),
    )(qkv, cos, sin, rot)


# ------------------------------- RoPE tables ---------------------------------
def rope_tables(T, dim_head, heads):
    inv_freq = 1.0 / (10000.0 ** (jnp.arange(0, dim_head, 2, dtype=jnp.float32) / dim_head))
    pos = jnp.arange(T, dtype=jnp.float32)
    freqs = pos[:, None] * inv_freq[None, :]                    # (T, Dh/2)
    freqs = jnp.repeat(freqs, 2, axis=-1)                       # [f0,f0,f1,f1,...] (T, Dh)
    freqs = jnp.tile(freqs, (1, heads))                         # same table per head -> (T, D)
    return jnp.cos(freqs), jnp.sin(freqs)


def rotate_half_matrix(dim):
    # rotate_half(x) = x @ R with 2x2 blocks [[0, 1], [-1, 0]] along the diag.
    # dim = heads * dim_head (pairs never cross head boundaries).
    R = jnp.zeros((dim, dim), jnp.float32)
    idx = jnp.arange(0, dim, 2)
    R = R.at[idx + 1, idx].set(-1.0)
    R = R.at[idx, idx + 1].set(1.0)
    return R


# ------------------------------ parameter init -------------------------------
def init_kan(key, d_in, d_out):
    """Returns the fused (9*d_in, d_out) bf16 weight: [base; spline_0..7]."""
    kb, ks = jax.random.split(key)
    w_base = jax.random.normal(kb, (d_in, d_out), jnp.float32) / math.sqrt(d_in)
    # spline_scaler folded into the spline weight (synthetic deterministic init)
    w_spline = jax.random.normal(ks, (NUM_COEFF, d_in, d_out), jnp.float32) * (0.1 / math.sqrt(d_in))
    w_comb = jnp.concatenate([w_base[None], w_spline], axis=0)  # (9, d_in, d_out)
    # bf16 matmul operands (f32 accumulation in-kernel) halve weight DMA bytes.
    return w_comb.reshape((NUM_COEFF + 1) * d_in, d_out).astype(jnp.bfloat16)


def init_params(key, num_tokens, dim, depth, heads, dim_head):
    keys = jax.random.split(key, 3 + depth)
    params = {
        "token_emb": jax.random.normal(keys[0], (num_tokens, dim), jnp.float32) * 0.02,
        "pos_emb": jax.random.normal(keys[1], (1024, dim), jnp.float32) * 0.02,
        "final_gamma": jnp.ones((dim,), jnp.float32),
    }
    layers = []
    for l in range(depth):
        lk = jax.random.split(keys[2 + l], 4)
        layers.append(dict(
            attn_gamma=jnp.ones((dim,), jnp.float32),
            ff_gamma=jnp.ones((dim,), jnp.float32),
            wqkv=init_kan(lk[0], dim, 3 * dim),
            wo=init_kan(lk[1], dim, dim),
            w1=init_kan(lk[2], dim, 4 * dim),
            w2=init_kan(lk[3], 4 * dim, dim),
        ))
    params["layers"] = layers
    params["logits"] = init_kan(keys[2 + depth], dim, num_tokens)
    return params


# ------------------------------- full forward --------------------------------
def infini_kan_transformer(tokens, params, heads, dim_head):
    B, T = tokens.shape
    D = params["token_emb"].shape[1]
    assert D == heads * dim_head

    x = params["token_emb"][tokens] + params["pos_emb"][:T][None, :, :]   # (B, T, D)
    x = x.reshape(B * T, D)                                               # dropout = identity (eval)

    cos, sin = rope_tables(T, dim_head, heads)
    R = rotate_half_matrix(D)
    scale = dim_head ** (-0.5)

    for lp in params["layers"]:
        # ---- CausalAttention (no residual around attention, per reference) ----
        qkv = kan_linear(x, lp["wqkv"], gamma=lp["attn_gamma"])           # RMSNorm fused
        o = attention(qkv.reshape(B, T, 3 * D), cos, sin, R, heads, dim_head, scale)
        x = kan_linear(o.reshape(B * T, D), lp["wo"])                     # to_out

        # ---- KANFeedForward + residual (RMSNorm / GELU / residual fused) ----
        h = kan_linear(x, lp["w1"], gamma=lp["ff_gamma"], activation="gelu")
        x = kan_linear(h, lp["w2"], residual=x)

    logits = kan_linear(x, params["logits"], gamma=params["final_gamma"])  # final norm fused
    return logits.reshape(B, T, -1)


# ----------------------------------- main ------------------------------------
if __name__ == "__main__":
    num_tokens, dim, depth, heads, dim_head = 64, 32, 2, 2, 16
    B, T = 2, 8

    key = jax.random.PRNGKey(0)
    pkey, tkey = jax.random.split(key)
    params = init_params(pkey, num_tokens, dim, depth, heads, dim_head)
    tokens = jax.random.randint(tkey, (B, T), 0, num_tokens)

    logits = infini_kan_transformer(tokens, params, heads, dim_head)
    logits = jax.block_until_ready(logits)

    assert logits.shape == (B, T, num_tokens), logits.shape
    assert bool(jnp.all(jnp.isfinite(logits)))
    print("KERNEL_OK")
</pallas_src>

<mosaic_0001>
module attributes {stable_mosaic.version = 11 : i64} {
  func.func @_kan_kernel(%arg0: i32, %arg1: i32, %arg2: memref<16x32xf32, #tpu.memory_space<vmem>>, %arg3: memref<288x96xbf16, #tpu.memory_space<vmem>>, %arg4: memref<1x32xf32, #tpu.memory_space<vmem>>, %arg5: memref<16x96xf32, #tpu.memory_space<vmem>>, %arg6: memref<16x288xbf16, #tpu.memory_space<vmem>>) attributes {dimension_semantics = [#tpu.dimension_semantics<parallel>, #tpu.dimension_semantics<arbitrary>], iteration_bounds = array<i64: 1, 1>, scalar_prefetch = 0 : i64, scratch_operands = 1 : i64, tpu.core_type = #tpu.core_type<tc>, window_params = [{transform_indices = @transform_0, window_bounds = array<i64: 16, 32>}, {transform_indices = @transform_1, window_bounds = array<i64: 288, 96>}, {pipeline_mode = #tpu.pipeline_mode<synchronous>, transform_indices = @transform_2, window_bounds = array<i64: 1, 32>}, {transform_indices = @transform_3, window_bounds = array<i64: 16, 96>}]} {
    %c0_i32 = arith.constant 0 : i32
    %0 = arith.cmpi eq, %arg1, %c0_i32 : i32
    %1 = arith.extui %0 : i1 to i32
    %c0_i32_0 = arith.constant 0 : i32
    %2 = arith.cmpi ne, %1, %c0_i32_0 : i32
    scf.if %2 {
      %c0_6 = arith.constant 0 : index
      %c0_7 = arith.constant 0 : index
      %7 = vector.load %arg2[%c0_6, %c0_7] : memref<16x32xf32, #tpu.memory_space<vmem>>, vector<16x32xf32>
      %8 = arith.mulf %7, %7 : vector<16x32xf32>
      %cst_8 = arith.constant dense<0.000000e+00> : vector<16xf32>
      %9 = vector.multi_reduction <add>, %8, %cst_8 [1] : vector<16x32xf32> to vector<16xf32>
      %10 = vector.shape_cast %9 : vector<16xf32> to vector<16x1xf32>
      %11 = math.sqrt %10 : vector<16x1xf32>
      %cst_9 = arith.constant 9.99999996E-13 : f32
      %12 = vector.broadcast %cst_9 : f32 to vector<16x1xf32>
      %13 = arith.maximumf %11, %12 : vector<16x1xf32>
      %cst_10 = arith.constant 5.65685415 : f32
      %14 = vector.broadcast %cst_10 : f32 to vector<16x1xf32>
      %15 = arith.divf %14, %13 : vector<16x1xf32>
      %16 = vector.broadcast %15 : vector<16x1xf32> to vector<16x32xf32>
      %17 = arith.mulf %7, %16 : vector<16x32xf32>
      %c0_11 = arith.constant 0 : index
      %c0_12 = arith.constant 0 : index
      %18 = vector.load %arg4[%c0_11, %c0_12] : memref<1x32xf32, #tpu.memory_space<vmem>>, vector<1x32xf32>
      %19 = vector.broadcast %18 : vector<1x32xf32> to vector<16x32xf32>
      %20 = arith.mulf %17, %19 : vector<16x32xf32>
      %21 = arith.negf %20 : vector<16x32xf32>
      %22 = math.exp %21 : vector<16x32xf32>
      %cst_13 = arith.constant 1.000000e+00 : f32
      %23 = vector.broadcast %cst_13 : f32 to vector<16x32xf32>
      %24 = arith.addf %23, %22 : vector<16x32xf32>
      %25 = arith.divf %23, %24 : vector<16x32xf32>
      %26 = arith.mulf %20, %25 : vector<16x32xf32>
      %cst_14 = arith.constant -2.200000e+00 : f32
      %27 = vector.broadcast %cst_14 : f32 to vector<16x32xf32>
      %28 = arith.cmpf oge, %20, %27 : vector<16x32xf32>
      %29 = arith.extui %28 : vector<16x32xi1> to vector<16x32xi32>
      %30 = arith.sitofp %29 : vector<16x32xi32> to vector<16x32xf32>
      %cst_15 = arith.constant -1.800000e+00 : f32
      %31 = vector.broadcast %cst_15 : f32 to vector<16x32xf32>
      %32 = arith.cmpf oge, %20, %31 : vector<16x32xf32>
      %33 = arith.extui %32 : vector<16x32xi1> to vector<16x32xi32>
      %34 = arith.sitofp %33 : vector<16x32xi32> to vector<16x32xf32>
      %cst_16 = arith.constant -1.400000e+00 : f32
      %35 = vector.broadcast %cst_16 : f32 to vector<16x32xf32>
      %36 = arith.cmpf oge, %20, %35 : vector<16x32xf32>
      %37 = arith.extui %36 : vector<16x32xi1> to vector<16x32xi32>
      %38 = arith.sitofp %37 : vector<16x32xi32> to vector<16x32xf32>
      %cst_17 = arith.constant -1.000000e+00 : f32
      %39 = vector.broadcast %cst_17 : f32 to vector<16x32xf32>
      %40 = arith.cmpf oge, %20, %39 : vector<16x32xf32>
      %41 = arith.extui %40 : vector<16x32xi1> to vector<16x32xi32>
      %42 = arith.sitofp %41 : vector<16x32xi32> to vector<16x32xf32>
      %cst_18 = arith.constant -6.000000e-01 : f32
      %43 = vector.broadcast %cst_18 : f32 to vector<16x32xf32>
      %44 = arith.cmpf oge, %20, %43 : vector<16x32xf32>
      %45 = arith.extui %44 : vector<16x32xi1> to vector<16x32xi32>
      %46 = arith.sitofp %45 : vector<16x32xi32> to vector<16x32xf32>
      %cst_19 = arith.constant -2.000000e-01 : f32
      %47 = vector.broadcast %cst_19 : f32 to vector<16x32xf32>
      %48 = arith.cmpf oge, %20, %47 : vector<16x32xf32>
      %49 = arith.extui %48 : vector<16x32xi1> to vector<16x32xi32>
      %50 = arith.sitofp %49 : vector<16x32xi32> to vector<16x32xf32>
      %cst_20 = arith.constant 2.000000e-01 : f32
      %51 = vector.broadcast %cst_20 : f32 to vector<16x32xf32>
      %52 = arith.cmpf oge, %20, %51 : vector<16x32xf32>
      %53 = arith.extui %52 : vector<16x32xi1> to vector<16x32xi32>
      %54 = arith.sitofp %53 : vector<16x32xi32> to vector<16x32xf32>
      %cst_21 = arith.constant 6.000000e-01 : f32
      %55 = vector.broadcast %cst_21 : f32 to vector<16x32xf32>
      %56 = arith.cmpf oge, %20, %55 : vector<16x32xf32>
      %57 = arith.extui %56 : vector<16x32xi1> to vector<16x32xi32>
      %58 = arith.sitofp %57 : vector<16x32xi32> to vector<16x32xf32>
      %cst_22 = arith.constant 1.000000e+00 : f32
      %59 = vector.broadcast %cst_22 : f32 to vector<16x32xf32>
      %60 = arith.cmpf oge, %20, %59 : vector<16x32xf32>
      %61 = arith.extui %60 : vector<16x32xi1> to vector<16x32xi32>
      %62 = arith.sitofp %61 : vector<16x32xi32> to vector<16x32xf32>
      %cst_23 = arith.constant 1.400000e+00 : f32
      %63 = vector.broadcast %cst_23 : f32 to vector<16x32xf32>
      %64 = arith.cmpf oge, %20, %63 : vector<16x32xf32>
      %65 = arith.extui %64 : vector<16x32xi1> to vector<16x32xi32>
      %66 = arith.sitofp %65 : vector<16x32xi32> to vector<16x32xf32>
      %cst_24 = arith.constant 1.800000e+00 : f32
      %67 = vector.broadcast %cst_24 : f32 to vector<16x32xf32>
      %68 = arith.cmpf oge, %20, %67 : vector<16x32xf32>
      %69 = arith.extui %68 : vector<16x32xi1> to vector<16x32xi32>
      %70 = arith.sitofp %69 : vector<16x32xi32> to vector<16x32xf32>
      %cst_25 = arith.constant 2.200000e+00 : f32
      %71 = vector.broadcast %cst_25 : f32 to vector<16x32xf32>
      %72 = arith.cmpf oge, %20, %71 : vector<16x32xf32>
      %73 = arith.extui %72 : vector<16x32xi1> to vector<16x32xi32>
      %74 = arith.sitofp %73 : vector<16x32xi32> to vector<16x32xf32>
      %75 = arith.subf %30, %34 : vector<16x32xf32>
      %76 = arith.subf %34, %38 : vector<16x32xf32>
      %77 = arith.subf %38, %42 : vector<16x32xf32>
      %78 = arith.subf %42, %46 : vector<16x32xf32>
      %79 = arith.subf %46, %50 : vector<16x32xf32>
      %80 = arith.subf %50, %54 : vector<16x32xf32>
      %81 = arith.subf %54, %58 : vector<16x32xf32>
      %82 = arith.subf %58, %62 : vector<16x32xf32>
      %83 = arith.subf %62, %66 : vector<16x32xf32>
      %84 = arith.subf %66, %70 : vector<16x32xf32>
      %85 = arith.subf %70, %74 : vector<16x32xf32>
      %cst_26 = arith.constant -2.200000e+00 : f32
      %86 = vector.broadcast %cst_26 : f32 to vector<16x32xf32>
      %87 = arith.subf %20, %86 : vector<16x32xf32>
      %cst_27 = arith.constant 4.000000e-01 : f32
      %88 = vector.broadcast %cst_27 : f32 to vector<16x32xf32>
      %89 = arith.divf %87, %88 : vector<16x32xf32>
      %90 = arith.mulf %89, %75 : vector<16x32xf32>
      %cst_28 = arith.constant -1.400000e+00 : f32
      %91 = vector.broadcast %cst_28 : f32 to vector<16x32xf32>
      %92 = arith.subf %91, %20 : vector<16x32xf32>
      %cst_29 = arith.constant 4.000000e-01 : f32
      %93 = vector.broadcast %cst_29 : f32 to vector<16x32xf32>
      %94 = arith.divf %92, %93 : vector<16x32xf32>
      %95 = arith.mulf %94, %76 : vector<16x32xf32>
      %96 = arith.addf %90, %95 : vector<16x32xf32>
      %cst_30 = arith.constant -1.800000e+00 : f32
      %97 = vector.broadcast %cst_30 : f32 to vector<16x32xf32>
      %98 = arith.subf %20, %97 : vector<16x32xf32>
      %cst_31 = arith.constant 4.000000e-01 : f32
      %99 = vector.broadcast %cst_31 : f32 to vector<16x32xf32>
      %100 = arith.divf %98, %99 : vector<16x32xf32>
      %101 = arith.mulf %100, %76 : vector<16x32xf32>
      %cst_32 = arith.constant -1.000000e+00 : f32
      %102 = vector.broadcast %cst_32 : f32 to vector<16x32xf32>
      %103 = arith.subf %102, %20 : vector<16x32xf32>
      %cst_33 = arith.constant 4.000000e-01 : f32
      %104 = vector.broadcast %cst_33 : f32 to vector<16x32xf32>
      %105 = arith.divf %103, %104 : vector<16x32xf32>
      %106 = arith.mulf %105, %77 : vector<16x32xf32>
      %107 = arith.addf %101, %106 : vector<16x32xf32>
      %cst_34 = arith.constant -1.400000e+00 : f32
      %108 = vector.broadcast %cst_34 : f32 to vector<16x32xf32>
      %109 = arith.subf %20, %108 : vector<16x32xf32>
      %cst_35 = arith.constant 4.000000e-01 : f32
      %110 = vector.broadcast %cst_35 : f32 to vector<16x32xf32>
      %111 = arith.divf %109, %110 : vector<16x32xf32>
      %112 = arith.mulf %111, %77 : vector<16x32xf32>
      %cst_36 = arith.constant -6.000000e-01 : f32
      %113 = vector.broadcast %cst_36 : f32 to vector<16x32xf32>
      %114 = arith.subf %113, %20 : vector<16x32xf32>
      %cst_37 = arith.constant 4.000000e-01 : f32
      %115 = vector.broadcast %cst_37 : f32 to vector<16x32xf32>
      %116 = arith.divf %114, %115 : vector<16x32xf32>
      %117 = arith.mulf %116, %78 : vector<16x32xf32>
      %118 = arith.addf %112, %117 : vector<16x32xf32>
      %cst_38 = arith.constant -1.000000e+00 : f32
      %119 = vector.broadcast %cst_38 : f32 to vector<16x32xf32>
      %120 = arith.subf %20, %119 : vector<16x32xf32>
      %cst_39 = arith.constant 4.000000e-01 : f32
      %121 = vector.broadcast %cst_39 : f32 to vector<16x32xf32>
      %122 = arith.divf %120, %121 : vector<16x32xf32>
      %123 = arith.mulf %122, %78 : vector<16x32xf32>
      %cst_40 = arith.constant -2.000000e-01 : f32
      %124 = vector.broadcast %cst_40 : f32 to vector<16x32xf32>
      %125 = arith.subf %124, %20 : vector<16x32xf32>
      %cst_41 = arith.constant 4.000000e-01 : f32
      %126 = vector.broadcast %cst_41 : f32 to vector<16x32xf32>
      %127 = arith.divf %125, %126 : vector<16x32xf32>
      %128 = arith.mulf %127, %79 : vector<16x32xf32>
      %129 = arith.addf %123, %128 : vector<16x32xf32>
      %cst_42 = arith.constant -6.000000e-01 : f32
      %130 = vector.broadcast %cst_42 : f32 to vector<16x32xf32>
      %131 = arith.subf %20, %130 : vector<16x32xf32>
      %cst_43 = arith.constant 4.000000e-01 : f32
      %132 = vector.broadcast %cst_43 : f32 to vector<16x32xf32>
      %133 = arith.divf %131, %132 : vector<16x32xf32>
      %134 = arith.mulf %133, %79 : vector<16x32xf32>
      %cst_44 = arith.constant 2.000000e-01 : f32
      %135 = vector.broadcast %cst_44 : f32 to vector<16x32xf32>
      %136 = arith.subf %135, %20 : vector<16x32xf32>
      %cst_45 = arith.constant 4.000000e-01 : f32
      %137 = vector.broadcast %cst_45 : f32 to vector<16x32xf32>
      %138 = arith.divf %136, %137 : vector<16x32xf32>
      %139 = arith.mulf %138, %80 : vector<16x32xf32>
      %140 = arith.addf %134, %139 : vector<16x32xf32>
      %cst_46 = arith.constant -2.000000e-01 : f32
      %141 = vector.broadcast %cst_46 : f32 to vector<16x32xf32>
      %142 = arith.subf %20, %141 : vector<16x32xf32>
      %cst_47 = arith.constant 4.000000e-01 : f32
      %143 = vector.broadcast %cst_47 : f32 to vector<16x32xf32>
      %144 = arith.divf %142, %143 : vector<16x32xf32>
      %145 = arith.mulf %144, %80 : vector<16x32xf32>
      %cst_48 = arith.constant 6.000000e-01 : f32
      %146 = vector.broadcast %cst_48 : f32 to vector<16x32xf32>
      %147 = arith.subf %146, %20 : vector<16x32xf32>
      %cst_49 = arith.constant 4.000000e-01 : f32
      %148 = vector.broadcast %cst_49 : f32 to vector<16x32xf32>
      %149 = arith.divf %147, %148 : vector<16x32xf32>
      %150 = arith.mulf %149, %81 : vector<16x32xf32>
      %151 = arith.addf %145, %150 : vector<16x32xf32>
      %cst_50 = arith.constant 2.000000e-01 : f32
      %152 = vector.broadcast %cst_50 : f32 to vector<16x32xf32>
      %153 = arith.subf %20, %152 : vector<16x32xf32>
      %cst_51 = arith.constant 4.000000e-01 : f32
      %154 = vector.broadcast %cst_51 : f32 to vector<16x32xf32>
      %155 = arith.divf %153, %154 : vector<16x32xf32>
      %156 = arith.mulf %155, %81 : vector<16x32xf32>
      %cst_52 = arith.constant 1.000000e+00 : f32
      %157 = vector.broadcast %cst_52 : f32 to vector<16x32xf32>
      %158 = arith.subf %157, %20 : vector<16x32xf32>
      %cst_53 = arith.constant 4.000000e-01 : f32
      %159 = vector.broadcast %cst_53 : f32 to vector<16x32xf32>
      %160 = arith.divf %158, %159 : vector<16x32xf32>
      %161 = arith.mulf %160, %82 : vector<16x32xf32>
      %162 = arith.addf %156, %161 : vector<16x32xf32>
      %cst_54 = arith.constant 6.000000e-01 : f32
      %163 = vector.broadcast %cst_54 : f32 to vector<16x32xf32>
      %164 = arith.subf %20, %163 : vector<16x32xf32>
      %cst_55 = arith.constant 4.000000e-01 : f32
      %165 = vector.broadcast %cst_55 : f32 to vector<16x32xf32>
      %166 = arith.divf %164, %165 : vector<16x32xf32>
      %167 = arith.mulf %166, %82 : vector<16x32xf32>
      %cst_56 = arith.constant 1.400000e+00 : f32
      %168 = vector.broadcast %cst_56 : f32 to vector<16x32xf32>
      %169 = arith.subf %168, %20 : vector<16x32xf32>
      %cst_57 = arith.constant 4.000000e-01 : f32
      %170 = vector.broadcast %cst_57 : f32 to vector<16x32xf32>
      %171 = arith.divf %169, %170 : vector<16x32xf32>
      %172 = arith.mulf %171, %83 : vector<16x32xf32>
      %173 = arith.addf %167, %172 : vector<16x32xf32>
      %cst_58 = arith.constant 1.000000e+00 : f32
      %174 = vector.broadcast %cst_58 : f32 to vector<16x32xf32>
      %175 = arith.subf %20, %174 : vector<16x32xf32>
      %cst_59 = arith.constant 4.000000e-01 : f32
      %176 = vector.broadcast %cst_59 : f32 to vector<16x32xf32>
      %177 = arith.divf %175, %176 : vector<16x32xf32>
      %178 = arith.mulf %177, %83 : vector<16x32xf32>
      %cst_60 = arith.constant 1.800000e+00 : f32
      %179 = vector.broadcast %cst_60 : f32 to vector<16x32xf32>
      %180 = arith.subf %179, %20 : vector<16x32xf32>
      %cst_61 = arith.constant 4.000000e-01 : f32
      %181 = vector.broadcast %cst_61 : f32 to vector<16x32xf32>
      %182 = arith.divf %180, %181 : vector<16x32xf32>
      %183 = arith.mulf %182, %84 : vector<16x32xf32>
      %184 = arith.addf %178, %183 : vector<16x32xf32>
      %cst_62 = arith.constant 1.400000e+00 : f32
      %185 = vector.broadcast %cst_62 : f32 to vector<16x32xf32>
      %186 = arith.subf %20, %185 : vector<16x32xf32>
      %cst_63 = arith.constant 4.000000e-01 : f32
      %187 = vector.broadcast %cst_63 : f32 to vector<16x32xf32>
      %188 = arith.divf %186, %187 : vector<16x32xf32>
      %189 = arith.mulf %188, %84 : vector<16x32xf32>
      %cst_64 = arith.constant 2.200000e+00 : f32
      %190 = vector.broadcast %cst_64 : f32 to vector<16x32xf32>
      %191 = arith.subf %190, %20 : vector<16x32xf32>
      %cst_65 = arith.constant 4.000000e-01 : f32
      %192 = vector.broadcast %cst_65 : f32 to vector<16x32xf32>
      %193 = arith.divf %191, %192 : vector<16x32xf32>
      %194 = arith.mulf %193, %85 : vector<16x32xf32>
      %195 = arith.addf %189, %194 : vector<16x32xf32>
      %cst_66 = arith.constant -2.200000e+00 : f32
      %196 = vector.broadcast %cst_66 : f32 to vector<16x32xf32>
      %197 = arith.subf %20, %196 : vector<16x32xf32>
      %cst_67 = arith.constant 8.000000e-01 : f32
      %198 = vector.broadcast %cst_67 : f32 to vector<16x32xf32>
      %199 = arith.divf %197, %198 : vector<16x32xf32>
      %200 = arith.mulf %199, %96 : vector<16x32xf32>
      %cst_68 = arith.constant -1.000000e+00 : f32
      %201 = vector.broadcast %cst_68 : f32 to vector<16x32xf32>
      %202 = arith.subf %201, %20 : vector<16x32xf32>
      %cst_69 = arith.constant 8.000000e-01 : f32
      %203 = vector.broadcast %cst_69 : f32 to vector<16x32xf32>
      %204 = arith.divf %202, %203 : vector<16x32xf32>
      %205 = arith.mulf %204, %107 : vector<16x32xf32>
      %206 = arith.addf %200, %205 : vector<16x32xf32>
      %cst_70 = arith.constant -1.800000e+00 : f32
      %207 = vector.broadcast %cst_70 : f32 to vector<16x32xf32>
      %208 = arith.subf %20, %207 : vector<16x32xf32>
      %cst_71 = arith.constant 8.000000e-01 : f32
      %209 = vector.broadcast %cst_71 : f32 to vector<16x32xf32>
      %210 = arith.divf %208, %209 : vector<16x32xf32>
      %211 = arith.mulf %210, %107 : vector<16x32xf32>
      %cst_72 = arith.constant -6.000000e-01 : f32
      %212 = vector.broadcast %cst_72 : f32 to vector<16x32xf32>
      %213 = arith.subf %212, %20 : vector<16x32xf32>
      %cst_73 = arith.constant 8.000000e-01 : f32
      %214 = vector.broadcast %cst_73 : f32 to vector<16x32xf32>
      %215 = arith.divf %213, %214 : vector<16x32xf32>
      %216 = arith.mulf %215, %118 : vector<16x32xf32>
      %217 = arith.addf %211, %216 : vector<16x32xf32>
      %cst_74 = arith.constant -1.400000e+00 : f32
      %218 = vector.broadcast %cst_74 : f32 to vector<16x32xf32>
      %219 = arith.subf %20, %218 : vector<16x32xf32>
      %cst_75 = arith.constant 8.000000e-01 : f32
      %220 = vector.broadcast %cst_75 : f32 to vector<16x32xf32>
      %221 = arith.divf %219, %220 : vector<16x32xf32>
      %222 = arith.mulf %221, %118 : vector<16x32xf32>
      %cst_76 = arith.constant -2.000000e-01 : f32
      %223 = vector.broadcast %cst_76 : f32 to vector<16x32xf32>
      %224 = arith.subf %223, %20 : vector<16x32xf32>
      %cst_77 = arith.constant 8.000000e-01 : f32
      %225 = vector.broadcast %cst_77 : f32 to vector<16x32xf32>
      %226 = arith.divf %224, %225 : vector<16x32xf32>
      %227 = arith.mulf %226, %129 : vector<16x32xf32>
      %228 = arith.addf %222, %227 : vector<16x32xf32>
      %cst_78 = arith.constant -1.000000e+00 : f32
      %229 = vector.broadcast %cst_78 : f32 to vector<16x32xf32>
      %230 = arith.subf %20, %229 : vector<16x32xf32>
      %cst_79 = arith.constant 8.000000e-01 : f32
      %231 = vector.broadcast %cst_79 : f32 to vector<16x32xf32>
      %232 = arith.divf %230, %231 : vector<16x32xf32>
      %233 = arith.mulf %232, %129 : vector<16x32xf32>
      %cst_80 = arith.constant 2.000000e-01 : f32
      %234 = vector.broadcast %cst_80 : f32 to vector<16x32xf32>
      %235 = arith.subf %234, %20 : vector<16x32xf32>
      %cst_81 = arith.constant 8.000000e-01 : f32
      %236 = vector.broadcast %cst_81 : f32 to vector<16x32xf32>
      %237 = arith.divf %235, %236 : vector<16x32xf32>
      %238 = arith.mulf %237, %140 : vector<16x32xf32>
      %239 = arith.addf %233, %238 : vector<16x32xf32>
      %cst_82 = arith.constant -6.000000e-01 : f32
      %240 = vector.broadcast %cst_82 : f32 to vector<16x32xf32>
      %241 = arith.subf %20, %240 : vector<16x32xf32>
      %cst_83 = arith.constant 8.000000e-01 : f32
      %242 = vector.broadcast %cst_83 : f32 to vector<16x32xf32>
      %243 = arith.divf %241, %242 : vector<16x32xf32>
      %244 = arith.mulf %243, %140 : vector<16x32xf32>
      %cst_84 = arith.constant 6.000000e-01 : f32
      %245 = vector.broadcast %cst_84 : f32 to vector<16x32xf32>
      %246 = arith.subf %245, %20 : vector<16x32xf32>
      %cst_85 = arith.constant 8.000000e-01 : f32
      %247 = vector.broadcast %cst_85 : f32 to vector<16x32xf32>
      %248 = arith.divf %246, %247 : vector<16x32xf32>
      %249 = arith.mulf %248, %151 : vector<16x32xf32>
      %250 = arith.addf %244, %249 : vector<16x32xf32>
      %cst_86 = arith.constant -2.000000e-01 : f32
      %251 = vector.broadcast %cst_86 : f32 to vector<16x32xf32>
      %252 = arith.subf %20, %251 : vector<16x32xf32>
      %cst_87 = arith.constant 8.000000e-01 : f32
      %253 = vector.broadcast %cst_87 : f32 to vector<16x32xf32>
      %254 = arith.divf %252, %253 : vector<16x32xf32>
      %255 = arith.mulf %254, %151 : vector<16x32xf32>
      %cst_88 = arith.constant 1.000000e+00 : f32
      %256 = vector.broadcast %cst_88 : f32 to vector<16x32xf32>
      %257 = arith.subf %256, %20 : vector<16x32xf32>
      %cst_89 = arith.constant 8.000000e-01 : f32
      %258 = vector.broadcast %cst_89 : f32 to vector<16x32xf32>
      %259 = arith.divf %257, %258 : vector<16x32xf32>
      %260 = arith.mulf %259, %162 : vector<16x32xf32>
      %261 = arith.addf %255, %260 : vector<16x32xf32>
      %cst_90 = arith.constant 2.000000e-01 : f32
      %262 = vector.broadcast %cst_90 : f32 to vector<16x32xf32>
      %263 = arith.subf %20, %262 : vector<16x32xf32>
      %cst_91 = arith.constant 8.000000e-01 : f32
      %264 = vector.broadcast %cst_91 : f32 to vector<16x32xf32>
      %265 = arith.divf %263, %264 : vector<16x32xf32>
      %266 = arith.mulf %265, %162 : vector<16x32xf32>
      %cst_92 = arith.constant 1.400000e+00 : f32
      %267 = vector.broadcast %cst_92 : f32 to vector<16x32xf32>
      %268 = arith.subf %267, %20 : vector<16x32xf32>
      %cst_93 = arith.constant 8.000000e-01 : f32
      %269 = vector.broadcast %cst_93 : f32 to vector<16x32xf32>
      %270 = arith.divf %268, %269 : vector<16x32xf32>
      %271 = arith.mulf %270, %173 : vector<16x32xf32>
      %272 = arith.addf %266, %271 : vector<16x32xf32>
      %cst_94 = arith.constant 6.000000e-01 : f32
      %273 = vector.broadcast %cst_94 : f32 to vector<16x32xf32>
      %274 = arith.subf %20, %273 : vector<16x32xf32>
      %cst_95 = arith.constant 8.000000e-01 : f32
      %275 = vector.broadcast %cst_95 : f32 to vector<16x32xf32>
      %276 = arith.divf %274, %275 : vector<16x32xf32>
      %277 = arith.mulf %276, %173 : vector<16x32xf32>
      %cst_96 = arith.constant 1.800000e+00 : f32
      %278 = vector.broadcast %cst_96 : f32 to vector<16x32xf32>
      %279 = arith.subf %278, %20 : vector<16x32xf32>
      %cst_97 = arith.constant 8.000000e-01 : f32
      %280 = vector.broadcast %cst_97 : f32 to vector<16x32xf32>
      %281 = arith.divf %279, %280 : vector<16x32xf32>
      %282 = arith.mulf %281, %184 : vector<16x32xf32>
      %283 = arith.addf %277, %282 : vector<16x32xf32>
      %cst_98 = arith.constant 1.000000e+00 : f32
      %284 = vector.broadcast %cst_98 : f32 to vector<16x32xf32>
      %285 = arith.subf %20, %284 : vector<16x32xf32>
      %cst_99 = arith.constant 8.000000e-01 : f32
      %286 = vector.broadcast %cst_99 : f32 to vector<16x32xf32>
      %287 = arith.divf %285, %286 : vector<16x32xf32>
      %288 = arith.mulf %287, %184 : vector<16x32xf32>
      %cst_100 = arith.constant 2.200000e+00 : f32
      %289 = vector.broadcast %cst_100 : f32 to vector<16x32xf32>
      %290 = arith.subf %289, %20 : vector<16x32xf32>
      %cst_101 = arith.constant 8.000000e-01 : f32
      %291 = vector.broadcast %cst_101 : f32 to vector<16x32xf32>
      %292 = arith.divf %290, %291 : vector<16x32xf32>
      %293 = arith.mulf %292, %195 : vector<16x32xf32>
      %294 = arith.addf %288, %293 : vector<16x32xf32>
      %cst_102 = arith.constant -2.200000e+00 : f32
      %295 = vector.broadcast %cst_102 : f32 to vector<16x32xf32>
      %296 = arith.subf %20, %295 : vector<16x32xf32>
      %cst_103 = arith.constant 1.200000e+00 : f32
      %297 = vector.broadcast %cst_103 : f32 to vector<16x32xf32>
      %298 = arith.divf %296, %297 : vector<16x32xf32>
      %299 = arith.mulf %298, %206 : vector<16x32xf32>
      %cst_104 = arith.constant -6.000000e-01 : f32
      %300 = vector.broadcast %cst_104 : f32 to vector<16x32xf32>
      %301 = arith.subf %300, %20 : vector<16x32xf32>
      %cst_105 = arith.constant 1.200000e+00 : f32
      %302 = vector.broadcast %cst_105 : f32 to vector<16x32xf32>
      %303 = arith.divf %301, %302 : vector<16x32xf32>
      %304 = arith.mulf %303, %217 : vector<16x32xf32>
      %305 = arith.addf %299, %304 : vector<16x32xf32>
      %cst_106 = arith.constant -1.800000e+00 : f32
      %306 = vector.broadcast %cst_106 : f32 to vector<16x32xf32>
      %307 = arith.subf %20, %306 : vector<16x32xf32>
      %cst_107 = arith.constant 1.200000e+00 : f32
      %308 = vector.broadcast %cst_107 : f32 to vector<16x32xf32>
      %309 = arith.divf %307, %308 : vector<16x32xf32>
      %310 = arith.mulf %309, %217 : vector<16x32xf32>
      %cst_108 = arith.constant -2.000000e-01 : f32
      %311 = vector.broadcast %cst_108 : f32 to vector<16x32xf32>
      %312 = arith.subf %311, %20 : vector<16x32xf32>
      %cst_109 = arith.constant 1.200000e+00 : f32
      %313 = vector.broadcast %cst_109 : f32 to vector<16x32xf32>
      %314 = arith.divf %312, %313 : vector<16x32xf32>
      %315 = arith.mulf %314, %228 : vector<16x32xf32>
      %316 = arith.addf %310, %315 : vector<16x32xf32>
      %cst_110 = arith.constant -1.400000e+00 : f32
      %317 = vector.broadcast %cst_110 : f32 to vector<16x32xf32>
      %318 = arith.subf %20, %317 : vector<16x32xf32>
      %cst_111 = arith.constant 1.200000e+00 : f32
      %319 = vector.broadcast %cst_111 : f32 to vector<16x32xf32>
      %320 = arith.divf %318, %319 : vector<16x32xf32>
      %321 = arith.mulf %320, %228 : vector<16x32xf32>
      %cst_112 = arith.constant 2.000000e-01 : f32
      %322 = vector.broadcast %cst_112 : f32 to vector<16x32xf32>
      %323 = arith.subf %322, %20 : vector<16x32xf32>
      %cst_113 = arith.constant 1.200000e+00 : f32
      %324 = vector.broadcast %cst_113 : f32 to vector<16x32xf32>
      %325 = arith.divf %323, %324 : vector<16x32xf32>
      %326 = arith.mulf %325, %239 : vector<16x32xf32>
      %327 = arith.addf %321, %326 : vector<16x32xf32>
      %cst_114 = arith.constant -1.000000e+00 : f32
      %328 = vector.broadcast %cst_114 : f32 to vector<16x32xf32>
      %329 = arith.subf %20, %328 : vector<16x32xf32>
      %cst_115 = arith.constant 1.200000e+00 : f32
      %330 = vector.broadcast %cst_115 : f32 to vector<16x32xf32>
      %331 = arith.divf %329, %330 : vector<16x32xf32>
      %332 = arith.mulf %331, %239 : vector<16x32xf32>
      %cst_116 = arith.constant 6.000000e-01 : f32
      %333 = vector.broadcast %cst_116 : f32 to vector<16x32xf32>
      %334 = arith.subf %333, %20 : vector<16x32xf32>
      %cst_117 = arith.constant 1.200000e+00 : f32
      %335 = vector.broadcast %cst_117 : f32 to vector<16x32xf32>
      %336 = arith.divf %334, %335 : vector<16x32xf32>
      %337 = arith.mulf %336, %250 : vector<16x32xf32>
      %338 = arith.addf %332, %337 : vector<16x32xf32>
      %cst_118 = arith.constant -6.000000e-01 : f32
      %339 = vector.broadcast %cst_118 : f32 to vector<16x32xf32>
      %340 = arith.subf %20, %339 : vector<16x32xf32>
      %cst_119 = arith.constant 1.200000e+00 : f32
      %341 = vector.broadcast %cst_119 : f32 to vector<16x32xf32>
      %342 = arith.divf %340, %341 : vector<16x32xf32>
      %343 = arith.mulf %342, %250 : vector<16x32xf32>
      %cst_120 = arith.constant 1.000000e+00 : f32
      %344 = vector.broadcast %cst_120 : f32 to vector<16x32xf32>
      %345 = arith.subf %344, %20 : vector<16x32xf32>
      %cst_121 = arith.constant 1.200000e+00 : f32
      %346 = vector.broadcast %cst_121 : f32 to vector<16x32xf32>
      %347 = arith.divf %345, %346 : vector<16x32xf32>
      %348 = arith.mulf %347, %261 : vector<16x32xf32>
      %349 = arith.addf %343, %348 : vector<16x32xf32>
      %cst_122 = arith.constant -2.000000e-01 : f32
      %350 = vector.broadcast %cst_122 : f32 to vector<16x32xf32>
      %351 = arith.subf %20, %350 : vector<16x32xf32>
      %cst_123 = arith.constant 1.200000e+00 : f32
      %352 = vector.broadcast %cst_123 : f32 to vector<16x32xf32>
      %353 = arith.divf %351, %352 : vector<16x32xf32>
      %354 = arith.mulf %353, %261 : vector<16x32xf32>
      %cst_124 = arith.constant 1.400000e+00 : f32
      %355 = vector.broadcast %cst_124 : f32 to vector<16x32xf32>
      %356 = arith.subf %355, %20 : vector<16x32xf32>
      %cst_125 = arith.constant 1.200000e+00 : f32
      %357 = vector.broadcast %cst_125 : f32 to vector<16x32xf32>
      %358 = arith.divf %356, %357 : vector<16x32xf32>
      %359 = arith.mulf %358, %272 : vector<16x32xf32>
      %360 = arith.addf %354, %359 : vector<16x32xf32>
      %cst_126 = arith.constant 2.000000e-01 : f32
      %361 = vector.broadcast %cst_126 : f32 to vector<16x32xf32>
      %362 = arith.subf %20, %361 : vector<16x32xf32>
      %cst_127 = arith.constant 1.200000e+00 : f32
      %363 = vector.broadcast %cst_127 : f32 to vector<16x32xf32>
      %364 = arith.divf %362, %363 : vector<16x32xf32>
      %365 = arith.mulf %364, %272 : vector<16x32xf32>
      %cst_128 = arith.constant 1.800000e+00 : f32
      %366 = vector.broadcast %cst_128 : f32 to vector<16x32xf32>
      %367 = arith.subf %366, %20 : vector<16x32xf32>
      %cst_129 = arith.constant 1.200000e+00 : f32
      %368 = vector.broadcast %cst_129 : f32 to vector<16x32xf32>
      %369 = arith.divf %367, %368 : vector<16x32xf32>
      %370 = arith.mulf %369, %283 : vector<16x32xf32>
      %371 = arith.addf %365, %370 : vector<16x32xf32>
      %cst_130 = arith.constant 6.000000e-01 : f32
      %372 = vector.broadcast %cst_130 : f32 to vector<16x32xf32>
      %373 = arith.subf %20, %372 : vector<16x32xf32>
      %cst_131 = arith.constant 1.200000e+00 : f32
      %374 = vector.broadcast %cst_131 : f32 to vector<16x32xf32>
      %375 = arith.divf %373, %374 : vector<16x32xf32>
      %376 = arith.mulf %375, %283 : vector<16x32xf32>
      %cst_132 = arith.constant 2.200000e+00 : f32
      %377 = vector.broadcast %cst_132 : f32 to vector<16x32xf32>
      %378 = arith.subf %377, %20 : vector<16x32xf32>
      %cst_133 = arith.constant 1.200000e+00 : f32
      %379 = vector.broadcast %cst_133 : f32 to vector<16x32xf32>
      %380 = arith.divf %378, %379 : vector<16x32xf32>
      %381 = arith.mulf %380, %294 : vector<16x32xf32>
      %382 = arith.addf %376, %381 : vector<16x32xf32>
      %383 = tpu.concatenate %26, %305, %316, %327, %338, %349, %360, %371, %382 in 1 : vector<16x32xf32>, vector<16x32xf32>, vector<16x32xf32>, vector<16x32xf32>, vector<16x32xf32>, vector<16x32xf32>, vector<16x32xf32>, vector<16x32xf32>, vector<16x32xf32> -> vector<16x288xf32>
      %384 = arith.truncf %383 : vector<16x288xf32> to vector<16x288xbf16>
      %c0_134 = arith.constant 0 : index
      %c0_135 = arith.constant 0 : index
      %385 = vector.load %arg6[%c0_134, %c0_135] : memref<16x288xbf16, #tpu.memory_space<vmem>>, vector<16x288xbf16>
      tpu.vector_store %arg6[%c0_134, %c0_135], %384 {strides = array<i32>} : memref<16x288xbf16, #tpu.memory_space<vmem>>, vector<16x288xbf16>,
    } else {
    }
    %c0 = arith.constant 0 : index
    %c0_1 = arith.constant 0 : index
    %3 = vector.load %arg6[%c0, %c0_1] : memref<16x288xbf16, #tpu.memory_space<vmem>>, vector<16x288xbf16>
    %c0_2 = arith.constant 0 : index
    %c0_3 = arith.constant 0 : index
    %4 = vector.load %arg3[%c0_2, %c0_3] : memref<288x96xbf16, #tpu.memory_space<vmem>>, vector<288x96xbf16>
    %cst = arith.constant dense<0.000000e+00> : vector<16x96xf32>
    %5 = tpu.matmul %3, %4, %cst {dimension_numbers = #tpu.dot_dimension_numbers<[1], [0], [0], [1], [0, 0, 1, 1], [], []>} : vector<16x288xbf16>, vector<288x96xbf16>, vector<16x96xf32> -> vector<16x96xf32>
    %c0_4 = arith.constant 0 : index
    %c0_5 = arith.constant 0 : index
    %6 = vector.load %arg5[%c0_4, %c0_5] : memref<16x96xf32, #tpu.memory_space<vmem>>, vector<16x96xf32>
    tpu.vector_store %arg5[%c0_4, %c0_5], %5 {strides = array<i32>} : memref<16x96xf32, #tpu.memory_space<vmem>>, vector<16x96xf32>,
    return
  }
  func.func @transform_0(%arg0: i32, %arg1: i32) -> (i32, i32) {
    %c0_i32 = arith.constant 0 : i32
    %c0_i32_0 = arith.constant 0 : i32
    return %arg0, %c0_i32 : i32, i32
  }
  func.func @transform_1(%arg0: i32, %arg1: i32) -> (i32, i32) {
    %c0_i32 = arith.constant 0 : i32
    %c0_i32_0 = arith.constant 0 : i32
    return %c0_i32, %arg1 : i32, i32
  }
  func.func @transform_2(%arg0: i32, %arg1: i32) -> (i32, i32) {
    %c0_i32 = arith.constant 0 : i32
    %c0_i32_0 = arith.constant 0 : i32
    %c0_i32_1 = arith.constant 0 : i32
    return %c0_i32, %c0_i32_0 : i32, i32
  }
  func.func @transform_3(%arg0: i32, %arg1: i32) -> (i32, i32) {
    %c0_i32 = arith.constant 0 : i32
    return %arg0, %arg1 : i32, i32
  }
}

</mosaic_0001>

<llo_original>
// kernel: tpu_custom_call.1
$region0: #{tpu_custom_call.1}
  #allocation0 [shape = 'u32[]', space=smem, size = 0x4, offset = 0x4, fixed_abs, tag = 'smem constant byte address 0x4 - core index']
  #allocation1 [shape = 'u32[144,128]{1,0:T(1,128)}', space=vmem, size = 0x12000, scoped, tag = 'internal scratch']
  #allocation2 [shape = 'bf16[16,288]{1,0:T(16,128)(2,1)}', space=vmem, size = 0x3000, scoped, tag = 'scratch operand']
  %s0 = inlined_call_operand.hbm [shape: f32[16,32], index: 0, kind: input, shape index: {}]
  %s1 = inlined_call_operand.hbm [shape: bf16[288,96], index: 1, kind: input, shape index: {}]
  %s2 = inlined_call_operand.hbm [shape: f32[1,32], index: 2, kind: input, shape index: {}]
  %s3 = inlined_call_operand.hbm [shape: f32[16,96], index: 3, kind: output, shape index: {}]
  %s4 = sld [smem:[#allocation0]]
  $region38: #{tpu_custom_call.1} parent=0
    _
  %s6 = ssub.s32 1, %s4
  %s7 = scalar_select 0, %s6, %s4
  $region1: #{tpu_custom_call.1} parent=0
    #allocation3 [shape = 'u8[8192]{0}', space=vmem, size = 0x2000, scoped, tag = 'input window, operand 0, single buffered']
    #allocation4 [shape = 's32[1]{0}', space=sflag, size = 0x4, scoped, tag = 'scoped memory for tpu_custom_call.1']
    #allocation5 [shape = 's32[1]{0}', space=sflag, size = 0x4, scoped, tag = 'scoped memory for tpu_custom_call.1']
    #allocation6 [shape = 'u8[73728]{0}', space=vmem, size = 0x12000, scoped, tag = 'input window, operand 1, single buffered']
    #allocation7 [shape = 's32[1]{0}', space=sflag, size = 0x4, scoped, tag = 'scoped memory for tpu_custom_call.1']
    #allocation8 [shape = 'u8[512]{0}', space=vmem, size = 0x400, scoped, tag = 'input window, operand 2, single buffered']
    #allocation9 [shape = 'u8[8192]{0}', space=vmem, size = 0x2000, scoped, tag = 'output window, operand 0, single buffered']
    %8 = vsyncpa [#allocation4], 0
    %9 = vsyncpa [#allocation7], 0
    %10 = vsyncpa [#allocation5], 0
    // Predicated region
    $region2: #{tpu_custom_call.1} parent=1 // pred_check
      _
    $region3: #{tpu_custom_call.1} parent=1 // pred_check_branch
      %12 = sbr.rel (0) target = $region5
    $region4: #{tpu_custom_call.1} parent=1 // pred_region
      %s14 = ssub.s32 256, 256
      %15 = vsyncadd [#allocation4], %s14
      %s16 = sshll.u32 [#allocation3], 4
      %s17 = int_to_ptr.vmem [resolvable:$true] %s16
      %22 = dma.hbm_to_vmem [thread:$0]  %s0, 256, %s17, [#allocation4], 128, 128, 8
    $region5: #{tpu_custom_call.1} parent=1 // pred_fallthru
      _
    // Predicated region
    $region6: #{tpu_custom_call.1} parent=1 // pred_check
      _
    $region7: #{tpu_custom_call.1} parent=1 // pred_check_branch
      %24 = sbr.rel (0) target = $region9
    $region8: #{tpu_custom_call.1} parent=1 // pred_region
      %s26 = ssub.s32 2304, 2304
      %27 = vsyncadd [#allocation7], %s26
      %s28 = sshll.u32 [#allocation6], 4
      %s29 = int_to_ptr.vmem [resolvable:$true] %s28
      %34 = dma.hbm_to_vmem [thread:$0]  %s1, 2304, %s29, [#allocation7], 64, 64, 4
    $region9: #{tpu_custom_call.1} parent=1 // pred_fallthru
      _
    // Predicated region
    $region10: #{tpu_custom_call.1} parent=1 // pred_check
      _
    $region11: #{tpu_custom_call.1} parent=1 // pred_check_branch
      %36 = sbr.rel (0) target = $region13
    $region12: #{tpu_custom_call.1} parent=1 // pred_region
      %s38 = ssub.s32 16, 16
      %39 = vsyncadd [#allocation7], %s38
      %s41 = sshll.u32 [#allocation8], 4
      %s42 = int_to_ptr.vmem [resolvable:$true] %s41
      %44 = dma.hbm_to_vmem [thread:$0]  %s2, 16, %s42, [#allocation7]
    $region13: #{tpu_custom_call.1} parent=1 // pred_fallthru
      _
    // Predicated region
    $region14: #{tpu_custom_call.1} parent=1 // pred_check
      _
    $region15: #{tpu_custom_call.1} parent=1 // pred_check_branch
      %46 = sbr.rel (0) target = $region17
    $region16: #{tpu_custom_call.1} parent=1 // pred_region
      %47 = dma.done [#allocation4], 256
    $region17: #{tpu_custom_call.1} parent=1 // pred_fallthru
      _
    // Predicated region
    $region18: #{tpu_custom_call.1} parent=1 // pred_check
      _
    $region19: #{tpu_custom_call.1} parent=1 // pred_check_branch
      %49 = sbr.rel (0) target = $region21
    $region20: #{tpu_custom_call.1} parent=1 // pred_region
      %50 = dma.done [#allocation7], 2304
    $region21: #{tpu_custom_call.1} parent=1 // pred_fallthru
      _
    // Predicated region
    $region22: #{tpu_custom_call.1} parent=1 // pred_check
      _
    $region23: #{tpu_custom_call.1} parent=1 // pred_check_branch
      %52 = sbr.rel (0) target = $region25
    $region24: #{tpu_custom_call.1} parent=1 // pred_region
      %53 = dma.done [#allocation7], 16
    $region25: #{tpu_custom_call.1} parent=1 // pred_fallthru
      _
    %p55 = scmp.eq.s32.totalorder 0, 0
    // Predicated region
    $region26: #{tpu_custom_call.1} parent=1 // pred_check
      %p56 = pneg %p55
    $region27: #{tpu_custom_call.1} parent=1 // pred_check_branch
      %58 = sbr.rel (%p56) target = $region29
    $region28: #{tpu_custom_call.1} parent=1 // pred_region
      %v59 = vld [vmem:[#allocation3] sm:$0xff]
      %v60 = vld [vmem:[#allocation3 + $0x8] sm:$0xff]
      %v61 = vmul.f32 %v59, %v59
      %v62 = vmul.f32 %v60, %v60
      %vm63 = vcmask 261120
      %v64 = vsel %vm63, %v61, 0.0
      %65 = vadd.xlane.f32.xlu0 %v64
      %v66 = vpop.xlane.xlu0 %65
      %v67 = vsel %vm63, %v62, 0.0
      %68 = vadd.xlane.f32.xlu0 %v67
      %v69 = vpop.xlane.xlu0 %68
      %v70 = vrsqrt.pop %v66
      %v71 = vmul.f32 %v66, %v70
      %vm72 = vcmp.eq.f32.partialorder %v66, inf
      %v73 = vsel %vm72, %v66, %v71
      %vm74 = vcmp.eq.f32.partialorder %v66, 0.0
      %v75 = vand.u32 %v66, 2147483648
      %v76 = vsel %vm74, %v75, %v73
      %v77 = vrsqrt.pop %v69
      %v78 = vmul.f32 %v69, %v77
      %vm79 = vcmp.eq.f32.partialorder %v69, inf
      %v80 = vsel %vm79, %v69, %v78
      %vm81 = vcmp.eq.f32.partialorder %v69, 0.0
      %v82 = vand.u32 %v69, 2147483648
      %v83 = vsel %vm81, %v82, %v80
      %v84 = vmax.f32 %v76, 1e-12
      %v85 = vmax.f32 %v83, 1e-12
      %v86 = vrcp.pop %v84
      %v87 = vmul.f32 5.656854, %v86
      %v88 = vrcp.pop %v85
      %v89 = vmul.f32 5.656854, %v88
      %v90 = vmul.f32 %v59, %v87
      %v91 = vmul.f32 %v60, %v89
      %v92 = vld [vmem:[#allocation8] sm:$0x1]
      %v94 = vlaneseq
      %v95 = vshrl.u32 %v94, 7
      %v96 = vsub.s32 0, %v95
      %v97 = vrot.slane %v92, %v96
      %v99 = vmul.f32 %v90, %v97
      %v100 = vmul.f32 %v91, %v97
      %v101 = vxor.u32 %v99, 2147483648
      %v102 = vxor.u32 %v100, 2147483648
      %v103 = vmul.f32 %v101, 1.442695
      %v104 = vpow.pop %v103
      %v105 = vmul.f32 %v102, 1.442695
      %v106 = vpow.pop %v105
      %v107 = vadd.f32 %v104, 1.0
      %v108 = vadd.f32 %v106, 1.0
      %v109 = vrcp.pop %v107
      %v110 = vmul.f32 1.0, %v109
      %v111 = vrcp.pop %v108
      %v112 = vmul.f32 1.0, %v111
      %v113 = vmul.f32 %v99, %v110
      %v114 = vmul.f32 %v100, %v112
      %vm115 = vcmp.ge.f32.partialorder %v99, -2.2
      %vm116 = vcmp.ge.f32.partialorder %v100, -2.2
      %v117 = vsel %vm115, 1, 0
      %v118 = vsel %vm116, 1, 0
      %v119 = vcvt.s32.f32 %v117
      %v120 = vcvt.s32.f32 %v118
      %vm121 = vcmp.ge.f32.partialorder %v99, -1.8
      %vm122 = vcmp.ge.f32.partialorder %v100, -1.8
      %v123 = vsel %vm121, 1, 0
      %v124 = vsel %vm122, 1, 0
      %v125 = vcvt.s32.f32 %v123
      %v126 = vcvt.s32.f32 %v124
      %vm127 = vcmp.ge.f32.partialorder %v99, -1.4
      %vm128 = vcmp.ge.f32.partialorder %v100, -1.4
      %v129 = vsel %vm127, 1, 0
      %v130 = vsel %vm128, 1, 0
      %v131 = vcvt.s32.f32 %v129
      %v132 = vcvt.s32.f32 %v130
      %vm133 = vcmp.ge.f32.partialorder %v99, -1.0
      %vm134 = vcmp.ge.f32.partialorder %v100, -1.0
      %v135 = vsel %vm133, 1, 0
      %v136 = vsel %vm134, 1, 0
      %v137 = vcvt.s32.f32 %v135
      %v138 = vcvt.s32.f32 %v136
      %vm139 = vcmp.ge.f32.partialorder %v99, -0.6
      %vm140 = vcmp.ge.f32.partialorder %v100, -0.6
      %v141 = vsel %vm139, 1, 0
      %v142 = vsel %vm140, 1, 0
      %v143 = vcvt.s32.f32 %v141
      %v144 = vcvt.s32.f32 %v142
      %vm145 = vcmp.ge.f32.partialorder %v99, -0.2
      %vm146 = vcmp.ge.f32.partialorder %v100, -0.2
      %v147 = vsel %vm145, 1, 0
      %v148 = vsel %vm146, 1, 0
      %v149 = vcvt.s32.f32 %v147
      %v150 = vcvt.s32.f32 %v148
      %vm151 = vcmp.ge.f32.partialorder %v99, 0.2
      %vm152 = vcmp.ge.f32.partialorder %v100, 0.2
      %v153 = vsel %vm151, 1, 0
      %v154 = vsel %vm152, 1, 0
      %v155 = vcvt.s32.f32 %v153
      %v156 = vcvt.s32.f32 %v154
      %vm157 = vcmp.ge.f32.partialorder %v99, 0.6
      %vm158 = vcmp.ge.f32.partialorder %v100, 0.6
      %v159 = vsel %vm157, 1, 0
      %v160 = vsel %vm158, 1, 0
      %v161 = vcvt.s32.f32 %v159
      %v162 = vcvt.s32.f32 %v160
      %vm163 = vcmp.ge.f32.partialorder %v99, 1.0
      %vm164 = vcmp.ge.f32.partialorder %v100, 1.0
      %v165 = vsel %vm163, 1, 0
      %v166 = vsel %vm164, 1, 0
      %v167 = vcvt.s32.f32 %v165
      %v168 = vcvt.s32.f32 %v166
      %vm169 = vcmp.ge.f32.partialorder %v99, 1.4
      %vm170 = vcmp.ge.f32.partialorder %v100, 1.4
      %v171 = vsel %vm169, 1, 0
      %v172 = vsel %vm170, 1, 0
      %v173 = vcvt.s32.f32 %v171
      %v174 = vcvt.s32.f32 %v172
      %vm175 = vcmp.ge.f32.partialorder %v99, 1.8
      %vm176 = vcmp.ge.f32.partialorder %v100, 1.8
      %v177 = vsel %vm175, 1, 0
      %v178 = vsel %vm176, 1, 0
      %v179 = vcvt.s32.f32 %v177
      %v180 = vcvt.s32.f32 %v178
      %vm181 = vcmp.ge.f32.partialorder %v99, 2.2
      %vm182 = vcmp.ge.f32.partialorder %v100, 2.2
      %v183 = vsel %vm181, 1, 0
      %v184 = vsel %vm182, 1, 0
      %v185 = vcvt.s32.f32 %v183
      %v186 = vcvt.s32.f32 %v184
      %v187 = vsub.f32 %v119, %v125
      %v188 = vsub.f32 %v120, %v126
      %v189 = vsub.f32 %v125, %v131
      %v190 = vsub.f32 %v126, %v132
      %v191 = vsub.f32 %v131, %v137
      %v192 = vsub.f32 %v132, %v138
      %v193 = vsub.f32 %v137, %v143
      %v194 = vsub.f32 %v138, %v144
      %v195 = vsub.f32 %v143, %v149
      %v196 = vsub.f32 %v144, %v150
      %v197 = vsub.f32 %v149, %v155
      %v198 = vsub.f32 %v150, %v156
      %v199 = vsub.f32 %v155, %v161
      %v200 = vsub.f32 %v156, %v162
      %v201 = vsub.f32 %v161, %v167
      %v202 = vsub.f32 %v162, %v168
      %v203 = vsub.f32 %v167, %v173
      %v204 = vsub.f32 %v168, %v174
      %v205 = vsub.f32 %v173, %v179
      %v206 = vsub.f32 %v174, %v180
      %v207 = vsub.f32 %v179, %v185
      %v208 = vsub.f32 %v180, %v186
      %v209 = vsub.f32 %v99, -2.2
      %v210 = vsub.f32 %v100, -2.2
      %v211 = vrcp.pop 0.4
      %v212 = vmul.f32 %v209, %v211
      %v213 = vmul.f32 %v210, %v211
      %v214 = vmul.f32 %v212, %v187
      %v215 = vmul.f32 %v213, %v188
      %v216 = vsub.f32 -1.4, %v99
      %v217 = vsub.f32 -1.4, %v100
      %v218 = vmul.f32 %v216, %v211
      %v219 = vmul.f32 %v217, %v211
      %v220 = vmul.f32 %v218, %v189
      %v221 = vmul.f32 %v219, %v190
      %v222 = vadd.f32 %v214, %v220
      %v223 = vadd.f32 %v215, %v221
      %v224 = vsub.f32 %v99, -1.8
      %v225 = vsub.f32 %v100, -1.8
      %v226 = vmul.f32 %v224, %v211
      %v227 = vmul.f32 %v225, %v211
      %v228 = vmul.f32 %v226, %v189
      %v229 = vmul.f32 %v227, %v190
      %v230 = vsub.f32 -1.0, %v99
      %v231 = vsub.f32 -1.0, %v100
      %v232 = vmul.f32 %v230, %v211
      %v233 = vmul.f32 %v231, %v211
      %v234 = vmul.f32 %v232, %v191
      %v235 = vmul.f32 %v233, %v192
      %v236 = vadd.f32 %v228, %v234
      %v237 = vadd.f32 %v229, %v235
      %v238 = vsub.f32 %v99, -1.4
      %v239 = vsub.f32 %v100, -1.4
      %v240 = vmul.f32 %v238, %v211
      %v241 = vmul.f32 %v239, %v211
      %v242 = vmul.f32 %v240, %v191
      %v243 = vmul.f32 %v241, %v192
      %v244 = vsub.f32 -0.6, %v99
      %v245 = vsub.f32 -0.6, %v100
      %v246 = vmul.f32 %v244, %v211
      %v247 = vmul.f32 %v245, %v211
      %v248 = vmul.f32 %v246, %v193
      %v249 = vmul.f32 %v247, %v194
      %v250 = vadd.f32 %v242, %v248
      %v251 = vadd.f32 %v243, %v249
      %v252 = vsub.f32 %v99, -1.0
      %v253 = vsub.f32 %v100, -1.0
      %v254 = vmul.f32 %v252, %v211
      %v255 = vmul.f32 %v253, %v211
      %v256 = vmul.f32 %v254, %v193
      %v257 = vmul.f32 %v255, %v194
      %v258 = vsub.f32 -0.2, %v99
      %v259 = vsub.f32 -0.2, %v100
      %v260 = vmul.f32 %v258, %v211
      %v261 = vmul.f32 %v259, %v211
      %v262 = vmul.f32 %v260, %v195
      %v263 = vmul.f32 %v261, %v196
      %v264 = vadd.f32 %v256, %v262
      %v265 = vadd.f32 %v257, %v263
      %v266 = vsub.f32 %v99, -0.6
      %v267 = vsub.f32 %v100, -0.6
      %v268 = vmul.f32 %v266, %v211
      %v269 = vmul.f32 %v267, %v211
      %v270 = vmul.f32 %v268, %v195
      %v271 = vmul.f32 %v269, %v196
      %v272 = vsub.f32 0.2, %v99
      %v273 = vsub.f32 0.2, %v100
      %v274 = vmul.f32 %v272, %v211
      %v275 = vmul.f32 %v273, %v211
      %v276 = vmul.f32 %v274, %v197
      %v277 = vmul.f32 %v275, %v198
      %v278 = vadd.f32 %v270, %v276
      %v279 = vadd.f32 %v271, %v277
      %v280 = vsub.f32 %v99, -0.2
      %v281 = vsub.f32 %v100, -0.2
      %v282 = vmul.f32 %v280, %v211
      %v283 = vmul.f32 %v281, %v211
      %v284 = vmul.f32 %v282, %v197
      %v285 = vmul.f32 %v283, %v198
      %v286 = vsub.f32 0.6, %v99
      %v287 = vsub.f32 0.6, %v100
      %v288 = vmul.f32 %v286, %v211
      %v289 = vmul.f32 %v287, %v211
      %v290 = vmul.f32 %v288, %v199
      %v291 = vmul.f32 %v289, %v200
      %v292 = vadd.f32 %v284, %v290
      %v293 = vadd.f32 %v285, %v291
      %v294 = vsub.f32 %v99, 0.2
      %v295 = vsub.f32 %v100, 0.2
      %v296 = vmul.f32 %v294, %v211
      %v297 = vmul.f32 %v295, %v211
      %v298 = vmul.f32 %v296, %v199
      %v299 = vmul.f32 %v297, %v200
      %v300 = vsub.f32 1.0, %v99
      %v301 = vsub.f32 1.0, %v100
      %v302 = vmul.f32 %v300, %v211
      %v303 = vmul.f32 %v301, %v211
      %v304 = vmul.f32 %v302, %v201
      %v305 = vmul.f32 %v303, %v202
      %v306 = vadd.f32 %v298, %v304
      %v307 = vadd.f32 %v299, %v305
      %v308 = vsub.f32 %v99, 0.6
      %v309 = vsub.f32 %v100, 0.6
      %v310 = vmul.f32 %v308, %v211
      %v311 = vmul.f32 %v309, %v211
      %v312 = vmul.f32 %v310, %v201
      %v313 = vmul.f32 %v311, %v202
      %v314 = vsub.f32 1.4, %v99
      %v315 = vsub.f32 1.4, %v100
      %v316 = vmul.f32 %v314, %v211
      %v317 = vmul.f32 %v315, %v211
      %v318 = vmul.f32 %v316, %v203
      %v319 = vmul.f32 %v317, %v204
      %v320 = vadd.f32 %v312, %v318
      %v321 = vadd.f32 %v313, %v319
      %v322 = vsub.f32 %v99, 1.0
      %v323 = vsub.f32 %v100, 1.0
      %v324 = vmul.f32 %v322, %v211
      %v325 = vmul.f32 %v323, %v211
      %v326 = vmul.f32 %v324, %v203
      %v327 = vmul.f32 %v325, %v204
      %v328 = vsub.f32 1.8, %v99
      %v329 = vsub.f32 1.8, %v100
      %v330 = vmul.f32 %v328, %v211
      %v331 = vmul.f32 %v329, %v211
      %v332 = vmul.f32 %v330, %v205
      %v333 = vmul.f32 %v331, %v206
      %v334 = vadd.f32 %v326, %v332
      %v335 = vadd.f32 %v327, %v333
      %v336 = vsub.f32 %v99, 1.4
      %v337 = vsub.f32 %v100, 1.4
      %v338 = vmul.f32 %v336, %v211
      %v339 = vmul.f32 %v337, %v211
      %v340 = vmul.f32 %v338, %v205
      %v341 = vmul.f32 %v339, %v206
      %v342 = vsub.f32 2.2, %v99
      %v343 = vsub.f32 2.2, %v100
      %v344 = vmul.f32 %v342, %v211
      %v345 = vmul.f32 %v343, %v211
      %v346 = vmul.f32 %v344, %v207
      %v347 = vmul.f32 %v345, %v208
      %v348 = vadd.f32 %v340, %v346
      %v349 = vadd.f32 %v341, %v347
      %v350 = vrcp.pop 0.8
      %v351 = vmul.f32 %v209, %v350
      %v352 = vmul.f32 %v210, %v350
      %v353 = vmul.f32 %v351, %v222
      %v354 = vmul.f32 %v352, %v223
      %v355 = vmul.f32 %v230, %v350
      %v356 = vmul.f32 %v231, %v350
      %v357 = vmul.f32 %v355, %v236
      %v358 = vmul.f32 %v356, %v237
      %v359 = vadd.f32 %v353, %v357
      %v360 = vadd.f32 %v354, %v358
      %v361 = vmul.f32 %v224, %v350
      %v362 = vmul.f32 %v225, %v350
      %v363 = vmul.f32 %v361, %v236
      %v364 = vmul.f32 %v362, %v237
      %v365 = vmul.f32 %v244, %v350
      %v366 = vmul.f32 %v245, %v350
      %v367 = vmul.f32 %v365, %v250
      %v368 = vmul.f32 %v366, %v251
      %v369 = vadd.f32 %v363, %v367
      %v370 = vadd.f32 %v364, %v368
      %v371 = vmul.f32 %v238, %v350
      %v372 = vmul.f32 %v239, %v350
      %v373 = vmul.f32 %v371, %v250
      %v374 = vmul.f32 %v372, %v251
      %v375 = vmul.f32 %v258, %v350
      %v376 = vmul.f32 %v259, %v350
      %v377 = vmul.f32 %v375, %v264
      %v378 = vmul.f32 %v376, %v265
      %v379 = vadd.f32 %v373, %v377
      %v380 = vadd.f32 %v374, %v378
      %v381 = vmul.f32 %v252, %v350
      %v382 = vmul.f32 %v253, %v350
      %v383 = vmul.f32 %v381, %v264
      %v384 = vmul.f32 %v382, %v265
      %v385 = vmul.f32 %v272, %v350
      %v386 = vmul.f32 %v273, %v350
      %v387 = vmul.f32 %v385, %v278
      %v388 = vmul.f32 %v386, %v279
      %v389 = vadd.f32 %v383, %v387
      %v390 = vadd.f32 %v384, %v388
      %v391 = vmul.f32 %v266, %v350
      %v392 = vmul.f32 %v267, %v350
      %v393 = vmul.f32 %v391, %v278
      %v394 = vmul.f32 %v392, %v279
      %v395 = vmul.f32 %v286, %v350
      %v396 = vmul.f32 %v287, %v350
      %v397 = vmul.f32 %v395, %v292
      %v398 = vmul.f32 %v396, %v293
      %v399 = vadd.f32 %v393, %v397
      %v400 = vadd.f32 %v394, %v398
      %v401 = vmul.f32 %v280, %v350
      %v402 = vmul.f32 %v281, %v350
      %v403 = vmul.f32 %v401, %v292
      %v404 = vmul.f32 %v402, %v293
      %v405 = vmul.f32 %v300, %v350
      %v406 = vmul.f32 %v301, %v350
      %v407 = vmul.f32 %v405, %v306
      %v408 = vmul.f32 %v406, %v307
      %v409 = vadd.f32 %v403, %v407
      %v410 = vadd.f32 %v404, %v408
      %v411 = vmul.f32 %v294, %v350
      %v412 = vmul.f32 %v295, %v350
      %v413 = vmul.f32 %v411, %v306
      %v414 = vmul.f32 %v412, %v307
      %v415 = vmul.f32 %v314, %v350
      %v416 = vmul.f32 %v315, %v350
      %v417 = vmul.f32 %v415, %v320
      %v418 = vmul.f32 %v416, %v321
      %v419 = vadd.f32 %v413, %v417
      %v420 = vadd.f32 %v414, %v418
      %v421 = vmul.f32 %v308, %v350
      %v422 = vmul.f32 %v309, %v350
      %v423 = vmul.f32 %v421, %v320
      %v424 = vmul.f32 %v422, %v321
      %v425 = vmul.f32 %v328, %v350
      %v426 = vmul.f32 %v329, %v350
      %v427 = vmul.f32 %v425, %v334
      %v428 = vmul.f32 %v426, %v335
      %v429 = vadd.f32 %v423, %v427
      %v430 = vadd.f32 %v424, %v428
      %v431 = vmul.f32 %v322, %v350
      %v432 = vmul.f32 %v323, %v350
      %v433 = vmul.f32 %v431, %v334
      %v434 = vmul.f32 %v432, %v335
      %v435 = vmul.f32 %v342, %v350
      %v436 = vmul.f32 %v343, %v350
      %v437 = vmul.f32 %v435, %v348
      %v438 = vmul.f32 %v436, %v349
      %v439 = vadd.f32 %v433, %v437
      %v440 = vadd.f32 %v434, %v438
      %v441 = vrcp.pop 1.2
      %v442 = vmul.f32 %v209, %v441
      %v443 = vmul.f32 %v210, %v441
      %v444 = vmul.f32 %v442, %v359
      %v445 = vmul.f32 %v443, %v360
      %v446 = vmul.f32 %v244, %v441
      %v447 = vmul.f32 %v245, %v441
      %v448 = vmul.f32 %v446, %v369
      %v449 = vmul.f32 %v447, %v370
      %v450 = vadd.f32 %v444, %v448
      %v451 = vadd.f32 %v445, %v449
      %v452 = vmul.f32 %v224, %v441
      %v453 = vmul.f32 %v225, %v441
      %v454 = vmul.f32 %v452, %v369
      %v455 = vmul.f32 %v453, %v370
      %v456 = vmul.f32 %v258, %v441
      %v457 = vmul.f32 %v259, %v441
      %v458 = vmul.f32 %v456, %v379
      %v459 = vmul.f32 %v457, %v380
      %v460 = vadd.f32 %v454, %v458
      %v461 = vadd.f32 %v455, %v459
      %v462 = vmul.f32 %v238, %v441
      %v463 = vmul.f32 %v239, %v441
      %v464 = vmul.f32 %v462, %v379
      %v465 = vmul.f32 %v463, %v380
      %v466 = vmul.f32 %v272, %v441
      %v467 = vmul.f32 %v273, %v441
      %v468 = vmul.f32 %v466, %v389
      %v469 = vmul.f32 %v467, %v390
      %v470 = vadd.f32 %v464, %v468
      %v471 = vadd.f32 %v465, %v469
      %v472 = vmul.f32 %v252, %v441
      %v473 = vmul.f32 %v253, %v441
      %v474 = vmul.f32 %v472, %v389
      %v475 = vmul.f32 %v473, %v390
      %v476 = vmul.f32 %v286, %v441
      %v477 = vmul.f32 %v287, %v441
      %v478 = vmul.f32 %v476, %v399
      %v479 = vmul.f32 %v477, %v400
      %v480 = vadd.f32 %v474, %v478
      %v481 = vadd.f32 %v475, %v479
      %v482 = vmul.f32 %v266, %v441
      %v483 = vmul.f32 %v267, %v441
      %v484 = vmul.f32 %v482, %v399
      %v485 = vmul.f32 %v483, %v400
      %v486 = vmul.f32 %v300, %v441
      %v487 = vmul.f32 %v301, %v441
      %v488 = vmul.f32 %v486, %v409
      %v489 = vmul.f32 %v487, %v410
      %v490 = vadd.f32 %v484, %v488
      %v491 = vadd.f32 %v485, %v489
      %v492 = vmul.f32 %v280, %v441
      %v493 = vmul.f32 %v281, %v441
      %v494 = vmul.f32 %v492, %v409
      %v495 = vmul.f32 %v493, %v410
      %v496 = vmul.f32 %v314, %v441
      %v497 = vmul.f32 %v315, %v441
      %v498 = vmul.f32 %v496, %v419
      %v499 = vmul.f32 %v497, %v420
      %v500 = vadd.f32 %v494, %v498
      %v501 = vadd.f32 %v495, %v499
      %v502 = vmul.f32 %v294, %v441
      %v503 = vmul.f32 %v295, %v441
      %v504 = vmul.f32 %v502, %v419
      %v505 = vmul.f32 %v503, %v420
      %v506 = vmul.f32 %v328, %v441
      %v507 = vmul.f32 %v329, %v441
      %v508 = vmul.f32 %v506, %v429
      %v509 = vmul.f32 %v507, %v430
      %v510 = vadd.f32 %v504, %v508
      %v511 = vadd.f32 %v505, %v509
      %v512 = vmul.f32 %v308, %v441
      %v513 = vmul.f32 %v309, %v441
      %v514 = vmul.f32 %v512, %v429
      %v515 = vmul.f32 %v513, %v430
      %v516 = vmul.f32 %v342, %v441
      %v517 = vmul.f32 %v343, %v441
      %v518 = vmul.f32 %v516, %v439
      %v519 = vmul.f32 %v517, %v440
      %v520 = vadd.f32 %v514, %v518
      %v521 = vadd.f32 %v515, %v519
      %524 = vrot.lane.b32.xlu0 %v450, 32
      %v525 = vpop.permute.xlu0 %524
      %526 = vrot.lane.b32.xlu0 %v451, 32
      %v527 = vpop.permute.xlu0 %526
      %532 = vrot.lane.b32.xlu0 %v460, 64
      %v533 = vpop.permute.xlu0 %532
      %534 = vrot.lane.b32.xlu0 %v461, 64
      %v535 = vpop.permute.xlu0 %534
      %540 = vrot.lane.b32.xlu0 %v470, 96
      %v541 = vpop.permute.xlu0 %540
      %542 = vrot.lane.b32.xlu0 %v471, 96
      %v543 = vpop.permute.xlu0 %542
      %548 = vrot.lane.b32.xlu0 %v490, 32
      %v549 = vpop.permute.xlu0 %548
      %550 = vrot.lane.b32.xlu0 %v491, 32
      %v551 = vpop.permute.xlu0 %550
      %556 = vrot.lane.b32.xlu0 %v500, 64
      %v557 = vpop.permute.xlu0 %556
      %558 = vrot.lane.b32.xlu0 %v501, 64
      %v559 = vpop.permute.xlu0 %558
      %564 = vrot.lane.b32.xlu0 %v510, 96
      %v565 = vpop.permute.xlu0 %564
      %566 = vrot.lane.b32.xlu0 %v511, 96
      %v567 = vpop.permute.xlu0 %566
      %v570 = vsel %vm63, %v113, %v525
      %v571 = vsel %vm63, %v114, %v527
      %vm572 = vcmask 523264
      %v573 = vsel %vm572, %v570, %v533
      %v574 = vsel %vm572, %v571, %v535
      %vm575 = vcmask 785408
      %v576 = vsel %vm575, %v573, %v541
      %v577 = vsel %vm575, %v574, %v543
      %v578 = vsel %vm63, %v480, %v549
      %v579 = vsel %vm63, %v481, %v551
      %v580 = vsel %vm572, %v578, %v557
      %v581 = vsel %vm572, %v579, %v559
      %v582 = vsel %vm575, %v580, %v565
      %v583 = vsel %vm575, %v581, %v567
      %v584 = vpack.c.bf16 %v577, %v576
      %v585 = vpack.c.bf16 %v583, %v582
      %v586 = vpack.c.bf16 %v521, %v520
      %587 = vst [vmem:[#allocation2] sm:$0xff] %v584
      %588 = vst [vmem:[#allocation2 + $0x8] sm:$0xff] %v585
      %589 = vst.msk [vmem:[#allocation2 + $0x10] sm:$0xff] %vm63, %v586
    $region29: #{tpu_custom_call.1} parent=1 // pred_fallthru
      _
    %v590 = vld [vmem:[#allocation2] sm:$0xff]
    %v591 = vld [vmem:[#allocation2 + $0x8] sm:$0xff]
    %v592 = vld [vmem:[#allocation2 + $0x10] sm:$0xff]
    %v593 = vld [vmem:[#allocation6] sm:$0xf]
    %v594 = vld [vmem:[#allocation6 + $0x4] sm:$0xf]
    %v595 = vld [vmem:[#allocation6 + $0x8] sm:$0xf]
    %v596 = vld [vmem:[#allocation6 + $0xc] sm:$0xf]
    %v597 = vld [vmem:[#allocation6 + $0x10] sm:$0xf]
    %v598 = vld [vmem:[#allocation6 + $0x14] sm:$0xf]
    %v599 = vld [vmem:[#allocation6 + $0x18] sm:$0xf]
    %v600 = vld [vmem:[#allocation6 + $0x1c] sm:$0xf]
    %v601 = vld [vmem:[#allocation6 + $0x20] sm:$0xf]
    %v602 = vld [vmem:[#allocation6 + $0x24] sm:$0xf]
    %v603 = vld [vmem:[#allocation6 + $0x28] sm:$0xf]
    %v604 = vld [vmem:[#allocation6 + $0x2c] sm:$0xf]
    %v605 = vld [vmem:[#allocation6 + $0x30] sm:$0xf]
    %v606 = vld [vmem:[#allocation6 + $0x34] sm:$0xf]
    %v607 = vld [vmem:[#allocation6 + $0x38] sm:$0xf]
    %v608 = vld [vmem:[#allocation6 + $0x3c] sm:$0xf]
    %v609 = vld [vmem:[#allocation6 + $0x40] sm:$0xf]
    %v610 = vld [vmem:[#allocation6 + $0x44] sm:$0xf]
    %v611 = vld [vmem:[#allocation6 + $0x48] sm:$0xf]
    %v612 = vld [vmem:[#allocation6 + $0x4c] sm:$0xf]
    %v613 = vld [vmem:[#allocation6 + $0x50] sm:$0xf]
    %v614 = vld [vmem:[#allocation6 + $0x54] sm:$0xf]
    %v615 = vld [vmem:[#allocation6 + $0x58] sm:$0xf]
    %v616 = vld [vmem:[#allocation6 + $0x5c] sm:$0xf]
    %v617 = vld [vmem:[#allocation6 + $0x60] sm:$0xf]
    %v618 = vld [vmem:[#allocation6 + $0x64] sm:$0xf]
    %v619 = vld [vmem:[#allocation6 + $0x68] sm:$0xf]
    %v620 = vld [vmem:[#allocation6 + $0x6c] sm:$0xf]
    %v621 = vld [vmem:[#allocation6 + $0x70] sm:$0xf]
    %v622 = vld [vmem:[#allocation6 + $0x74] sm:$0xf]
    %v623 = vld [vmem:[#allocation6 + $0x78] sm:$0xf]
    %v624 = vld [vmem:[#allocation6 + $0x7c] sm:$0xf]
    %v625 = vld [vmem:[#allocation6 + $0x80] sm:$0xf]
    %v626 = vld [vmem:[#allocation6 + $0x84] sm:$0xf]
    %v627 = vld [vmem:[#allocation6 + $0x88] sm:$0xf]
    %v628 = vld [vmem:[#allocation6 + $0x8c] sm:$0xf]
    %v665 = vunpack.c.l.b16 %v593
    %v666 = vunpack.c.l.b16 %v594
    %v667 = vunpack.c.l.b16 %v595
    %v668 = vunpack.c.l.b16 %v596
    %v669 = vunpack.c.l.b16 %v597
    %v670 = vunpack.c.l.b16 %v598
    %v671 = vunpack.c.l.b16 %v599
    %v672 = vunpack.c.l.b16 %v600
    %v673 = vunpack.c.l.b16 %v601
    %v674 = vunpack.c.l.b16 %v602
    %v675 = vunpack.c.l.b16 %v603
    %v676 = vunpack.c.l.b16 %v604
    %v677 = vunpack.c.l.b16 %v605
    %v678 = vunpack.c.l.b16 %v606
    %v679 = vunpack.c.l.b16 %v607
    %v680 = vunpack.c.l.b16 %v608
    %v681 = vunpack.c.l.b16 %v609
    %v682 = vunpack.c.l.b16 %v610
    %v683 = vunpack.c.l.b16 %v611
    %v684 = vunpack.c.l.b16 %v612
    %v685 = vunpack.c.l.b16 %v613
    %v686 = vunpack.c.l.b16 %v614
    %v687 = vunpack.c.l.b16 %v615
    %v688 = vunpack.c.l.b16 %v616
    %v689 = vunpack.c.l.b16 %v617
    %v690 = vunpack.c.l.b16 %v618
    %v691 = vunpack.c.l.b16 %v619
    %v692 = vunpack.c.l.b16 %v620
    %v693 = vunpack.c.l.b16 %v621
    %v694 = vunpack.c.l.b16 %v622
    %v695 = vunpack.c.l.b16 %v623
    %v696 = vunpack.c.l.b16 %v624
    %v697 = vunpack.c.l.b16 %v625
    %v698 = vunpack.c.l.b16 %v626
    %v699 = vunpack.c.l.b16 %v627
    %v700 = vunpack.c.l.b16 %v628
    %v701 = vpack.c.b16 %v666, %v665
    %v702 = vpack.c.b16 %v668, %v667
    %v703 = vpack.c.b16 %v670, %v669
    %v704 = vpack.c.b16 %v672, %v671
    %v705 = vpack.c.b16 %v674, %v673
    %v706 = vpack.c.b16 %v676, %v675
    %v707 = vpack.c.b16 %v678, %v677
    %v708 = vpack.c.b16 %v680, %v679
    %v709 = vpack.c.b16 %v682, %v681
    %v710 = vpack.c.b16 %v684, %v683
    %v711 = vpack.c.b16 %v686, %v685
    %v712 = vpack.c.b16 %v688, %v687
    %v713 = vpack.c.b16 %v690, %v689
    %v714 = vpack.c.b16 %v692, %v691
    %v715 = vpack.c.b16 %v694, %v693
    %v716 = vpack.c.b16 %v696, %v695
    %v717 = vpack.c.b16 %v698, %v697
    %v718 = vpack.c.b16 %v700, %v699
    %vm737 = vcmask 261120
    %v739 = vsel %vm737, %v592, 0
    %741 = vmatprep.subr.bf16.mxu0 0
    %742 = vmatpush1.bf16.msra.mxu0 %v701
    %743 = vmatprep.subr.bf16.mxu0 0
    %744 = vmatpush1.bf16.msra.mxu0 %v702
    %745 = vmatprep.subr.bf16.mxu0 0
    %746 = vmatpush1.bf16.msra.mxu0 %v703
    %747 = vmatprep.subr.bf16.mxu0 0
    %748 = vmatpush1.bf16.msra.mxu0 %v704
    %749 = vmatprep.subr.bf16.mxu0 0
    %750 = vmatpush1.bf16.msra.mxu0 %v705
    %751 = vmatprep.subr.bf16.mxu0 0
    %752 = vmatpush1.bf16.msra.mxu0 %v706
    %753 = vmatprep.subr.bf16.mxu0 0
    %754 = vmatpush1.bf16.msra.mxu0 %v707
    %755 = vmatprep.subr.bf16.mxu0 0
    %756 = vmatpush1.bf16.msra.mxu0 %v708
    %757 = vmatprep.subr.bf16.mxu0 0
    %758 = vmatpush1.bf16.msra.mxu0 %v709
    %759 = vmatprep.subr.bf16.mxu0 0
    %760 = vmatpush1.bf16.msra.mxu0 %v710
    %761 = vmatprep.subr.bf16.mxu0 0
    %762 = vmatpush1.bf16.msra.mxu0 %v711
    %763 = vmatprep.subr.bf16.mxu0 0
    %764 = vmatpush1.bf16.msra.mxu0 %v712
    %765 = vmatprep.subr.bf16.mxu0 0
    %766 = vmatpush1.bf16.msra.mxu0 %v713
    %767 = vmatprep.subr.bf16.mxu0 0
    %768 = vmatpush1.bf16.msra.mxu0 %v714
    %769 = vmatprep.subr.bf16.mxu0 0
    %770 = vmatpush1.bf16.msra.mxu0 %v715
    %771 = vmatprep.subr.bf16.mxu0 0
    %772 = vmatpush1.bf16.msra.mxu0 %v716
    %773 = vmatprep.mubr.bf16.mxu0 %v591
    %774 = vmatmul.mubr.bf16.gmra.mrb[0].mxu0 %v590
    %v775 = vpop.f32.mrb[0].mxu0
    %v776 = vadd.f32 0.0, %v775
    %v777 = vpop.f32.mrb[0].mxu0
    %v778 = vpop.f32.mrb[0].mxu0
    %v779 = vadd.f32 0.0, %v778
    %v780 = vpop.f32.mrb[0].mxu0
    %781 = vdwg.mxu0
    %782 = vmatprep.subr.bf16.mxu0 0
    %783 = vmatpush1.bf16.msra.mxu0 %v717
    %784 = vmatprep.subr.bf16.mxu0 0
    %785 = vmatpush1.bf16.msra.mxu0 %v718
    %786 = vmatprep.subr.bf16.mxu0 0
    %787 = vmatpush1.bf16.msra.mxu0 0
    %788 = vmatprep.subr.bf16.mxu0 0
    %789 = vmatpush1.bf16.msra.mxu0 0
    %790 = vmatprep.subr.bf16.mxu0 0
    %791 = vmatpush1.bf16.msra.mxu0 0
    %792 = vmatprep.subr.bf16.mxu0 0
    %793 = vmatpush1.bf16.msra.mxu0 0
    %794 = vmatprep.subr.bf16.mxu0 0
    %795 = vmatpush1.bf16.msra.mxu0 0
    %796 = vmatprep.subr.bf16.mxu0 0
    %797 = vmatpush1.bf16.msra.mxu0 0
    %798 = vmatprep.subr.bf16.mxu0 0
    %799 = vmatpush1.bf16.msra.mxu0 0
    %800 = vmatprep.subr.bf16.mxu0 0
    %801 = vmatpush1.bf16.msra.mxu0 0
    %802 = vmatprep.subr.bf16.mxu0 0
    %803 = vmatpush1.bf16.msra.mxu0 0
    %804 = vmatprep.subr.bf16.mxu0 0
    %805 = vmatpush1.bf16.msra.mxu0 0
    %806 = vmatprep.subr.bf16.mxu0 0
    %807 = vmatpush1.bf16.msra.mxu0 0
    %808 = vmatprep.subr.bf16.mxu0 0
    %809 = vmatpush1.bf16.msra.mxu0 0
    %810 = vmatprep.subr.bf16.mxu0 0
    %811 = vmatpush1.bf16.msra.mxu0 0
    %812 = vmatprep.subr.bf16.mxu0 0
    %813 = vmatpush1.bf16.msra.mxu0 0
    %814 = vmatprep.mubr.bf16.mxu0 0
    %815 = vmatmul.mubr.bf16.gmra.mrb[0].mxu0 %v739
    %v816 = vpop.f32.mrb[0].mxu0
    %v817 = vadd.f32 %v776, %v816
    %v818 = vpop.f32.mrb[0].mxu0
    %v819 = vpop.f32.mrb[0].mxu0
    %v820 = vadd.f32 %v779, %v819
    %v821 = vpop.f32.mrb[0].mxu0
    %822 = vdwg.mxu0
    %vm823 = vcmask 785408
    %824 = vst.msk [vmem:[#allocation9] sm:$0xff] %vm823, %v817
    %825 = vst.msk [vmem:[#allocation9 + $0x8] sm:$0xff] %vm823, %v820
    // Predicated region
    $region30: #{tpu_custom_call.1} parent=1 // pred_check
      _
    $region31: #{tpu_custom_call.1} parent=1 // pred_check_branch
      %827 = sbr.rel (0) target = $region33
    $region32: #{tpu_custom_call.1} parent=1 // pred_region
      %s829 = ssub.s32 256, 256
      %830 = vsyncadd [#allocation5], %s829
      %s831 = sshll.u32 [#allocation9], 4
      %s832 = int_to_ptr.vmem [resolvable:$true] %s831
      %837 = dma.vmem_to_hbm [thread:$0]  %s832, 256, %s3, [#allocation5], 128, 128, 8
    $region33: #{tpu_custom_call.1} parent=1 // pred_fallthru
      _
    // Predicated region
    $region34: #{tpu_custom_call.1} parent=1 // pred_check
      _
    $region35: #{tpu_custom_call.1} parent=1 // pred_check_branch
      %839 = sbr.rel (0) target = $region37
    $region36: #{tpu_custom_call.1} parent=1 // pred_region
      %840 = dma.done [#allocation5], 256
    $region37: #{tpu_custom_call.1} parent=1 // pred_fallthru
      _
    %841 = vsyncpa [#allocation4], 1
    %842 = vsyncpa [#allocation7], 1
    %843 = vsyncpa [#allocation5], 1

</llo_original>
